<compile_context>
chip_gen: v7x
topology: tpu7x:2x2x1
jax: 0.10.0
libtpu: 0.0.40
codegen_flags: <defaults>
</compile_context>

<pallas_src>
import functools

import jax
import jax.numpy as jnp
from jax.experimental import pallas as pl
from jax.experimental.pallas import tpu as pltpu


def _round_up(x, m):
    return ((x + m - 1) // m) * m


def _vmem_capacity_bytes():
    """Best-effort per-core VMEM capacity query; conservative default on failure."""
    try:
        return int(pltpu.get_tpu_info().vmem_capacity_bytes)
    except Exception:
        return 64 * 1024 * 1024  # conservative (v7x per-TensorCore VMEM)


def _mlp_kernel(*refs, n_hidden, activation):
    """Fused MLP forward.

    refs = (x_ref, w0_ref, b0_ref, ..., wL_ref, bL_ref, o_ref)
      x_ref: bf16 [TB, K0p]   w_i: bf16 [K_ip, N_ip]   b_i: f32 [1, N_ip]
      o_ref: f32 [TB, N_Lp]
    """
    x_ref = refs[0]
    o_ref = refs[-1]
    wb = refs[1:-1]

    h = x_ref[...]                                    # bf16
    for i in range(n_hidden + 1):
        w = wb[2 * i][...]                            # bf16 -> MXU operand
        b = wb[2 * i + 1][...]                        # f32
        # bf16 x bf16 matmul with f32 accumulation on the MXU; bias add on VPU.
        acc = jnp.dot(h, w, preferred_element_type=jnp.float32) + b
        if i < n_hidden:
            if activation == "relu":
                acc = jnp.maximum(acc, 0.0)           # VPU
            elif activation == "tanh":
                acc = jnp.tanh(acc)                   # EUP
            else:
                acc = jax.nn.sigmoid(acc)             # EUP
            h = acc.astype(jnp.bfloat16)              # back to bf16 for next MXU layer
        else:
            h = acc                                   # keep final layer in f32
    o_ref[...] = h.astype(o_ref.dtype)


def _mlp_forward(x, *padded_wb, in_dim, out_dim, n_hidden, activation,
                 vmem_cap, single_buffer_weights):
    """x: [B, in_dim] float. padded_wb: (w0_p bf16, b0_p f32, ..., wL_p, bL_p)."""
    B = x.shape[0]
    big_vmem = vmem_cap >= 100 * 1024 * 1024          # v5e/v6e (128 MiB) vs v7x (64 MiB)

    # Batch tile: 8-aligned (sublanes); weights are resident so bigger tiles just
    # amortize per-grid-step overhead. 512 cap on big-VMEM chips, 256 on v7x.
    tb_cap = 512 if big_vmem else 256
    TB = min(_round_up(B, 8), tb_cap)
    Bp = _round_up(B, TB)

    Kp0 = padded_wb[0].shape[0]
    Np_last = padded_wb[-1].shape[1]

    # Single pad op (zero rows/cols keep the padded matmul chain exact).
    x_p = jnp.pad(x.astype(jnp.bfloat16), ((0, Bp - B), (0, Kp0 - in_dim)))

    # ---- derived VMEM budget -------------------------------------------------
    wb_bytes = sum(int(a.size) * a.dtype.itemsize for a in padded_wb)
    wb_bytes *= 1 if single_buffer_weights else 2               # buffer count
    x_bytes = 2 * TB * Kp0 * 2                                  # bf16 x tile, 2 bufs
    o_bytes = 2 * TB * Np_last * 4                              # f32 out tile, 2 bufs
    widest_n = max(a.shape[1] for a in padded_wb[::2])
    act_bytes = 2 * TB * widest_n * 4                           # live f32 acc / h
    derived = wb_bytes + x_bytes + o_bytes + act_bytes
    cap = (100 * 1024 * 1024) if big_vmem else (56 * 1024 * 1024)
    vmem_limit = int(min(cap, max(derived * 5 // 4 + (2 << 20), 32 * 1024 * 1024)))
    # TODO(synk): when wb_bytes alone exceeds this budget (large hidden dims on
    # v7x), switch the affected layers to K-tiled weights with a VMEM accumulator
    # or manual double-buffered weight DMA (memory_space=pl.ANY + make_async_copy).

    def _weight_spec(shape):
        if single_buffer_weights:
            # Constant block index across the grid -> never re-fetched; a single
            # VMEM buffer suffices (halves resident weight VMEM vs. default 2x).
            return pl.BlockSpec(shape, lambda i: (0, 0),
                                pipeline_mode=pl.Buffered(1))
        return pl.BlockSpec(shape, lambda i: (0, 0))

    in_specs = [pl.BlockSpec((TB, Kp0), lambda i: (i, 0))]
    in_specs += [_weight_spec(a.shape) for a in padded_wb]

    out_p = pl.pallas_call(
        functools.partial(_mlp_kernel, n_hidden=n_hidden, activation=activation),
        out_shape=jax.ShapeDtypeStruct((Bp, Np_last), jnp.float32),
        grid=(Bp // TB,),
        in_specs=in_specs,
        # Lane-dense (>=128) output block; padding is sliced off once outside.
        out_specs=pl.BlockSpec((TB, Np_last), lambda i: (i, 0)),
        compiler_params=pltpu.CompilerParams(
            dimension_semantics=("parallel",),        # batch tiles split across TCs
            vmem_limit_bytes=vmem_limit,
        ),
    )(x_p, *padded_wb)

    return out_p[:B, :out_dim]


class MLPPallas:
    """Pallas port of the PyTorch MLP (relu / tanh / sigmoid activations)."""

    def __init__(self, inputs=1, outputs=1, hidden_layers=(100,),
                 activation="relu", key=jax.random.PRNGKey(0)):
        assert activation in ("relu", "tanh", "sigmoid"), \
            'Use "relu","tanh" or "sigmoid" as activation.'
        self.activation = activation
        self.inputs = inputs
        self.outputs = outputs
        self.net_structure = [inputs, *hidden_layers, outputs]
        self.n_hidden = len(hidden_layers)

        self.params = []      # unpadded f32 (w [K,N], b [N]) -- reference / export
        self._padded = []     # interleaved padded (w bf16 [Kp,Np], b f32 [1,Np])
        for i in range(len(self.net_structure) - 1):
            fan_in = self.net_structure[i]
            fan_out = self.net_structure[i + 1]
            key, kw, kb = jax.random.split(key, 3)
            # Deterministic init mimicking nn.Linear (uniform in +-1/sqrt(fan_in)).
            bound = 1.0 / (fan_in ** 0.5)
            w = jax.random.uniform(kw, (fan_in, fan_out), jnp.float32, -bound, bound)
            b = jax.random.uniform(kb, (fan_out,), jnp.float32, -bound, bound)
            self.params.append((w, b))

            # Pad once at init. (8,128)-aligned; note round_up(.,128) already pads
            # dims in (128,256] to 256, i.e. full 256-wide MXU occupancy on v6e/v7x.
            Kp = _round_up(fan_in, 128)
            Np = _round_up(fan_out, 128)
            # bf16 weights: zero padding is exact in bf16, preserving the
            # chained-padding invariant.
            w_p = jnp.zeros((Kp, Np), jnp.bfloat16).at[:fan_in, :fan_out].set(
                w.astype(jnp.bfloat16))
            # Biases stay f32: added directly to the f32 MXU accumulator.
            b_p = jnp.zeros((1, Np), jnp.float32).at[0, :fan_out].set(b)
            self._padded.extend([w_p, b_p])

        vmem_cap = _vmem_capacity_bytes()
        common = dict(in_dim=inputs, out_dim=outputs, n_hidden=self.n_hidden,
                      activation=activation, vmem_cap=vmem_cap)
        self._fwd_fast = jax.jit(functools.partial(
            _mlp_forward, single_buffer_weights=True, **common))
        self._fwd_safe = jax.jit(functools.partial(
            _mlp_forward, single_buffer_weights=False, **common))
        self._forward = None

    def __call__(self, x):
        if self._forward is None:
            try:
                out = self._fwd_fast(x, *self._padded)
                jax.block_until_ready(out)
                self._forward = self._fwd_fast
                return out
            except Exception:
                # pipeline_mode=pl.Buffered(1) not accepted by this jax/libtpu:
                # fall back to default double-buffered weight blocks.
                self._forward = self._fwd_safe
        return self._forward(x, *self._padded)


# ----------------------------- references -----------------------------------

def _apply_act(h, activation):
    if activation == "relu":
        return jnp.maximum(h, 0.0)
    if activation == "tanh":
        return jnp.tanh(h)
    return jax.nn.sigmoid(h)


def mlp_reference_bf16(model, x):
    """Pure-JAX reference that mirrors the kernel numerics (bf16 MXU, f32 accum)."""
    h = x.astype(jnp.bfloat16)
    for i, (w, b) in enumerate(model.params):
        acc = jnp.dot(h, w.astype(jnp.bfloat16),
                      preferred_element_type=jnp.float32) + b
        if i < model.n_hidden:
            h = _apply_act(acc, model.activation).astype(jnp.bfloat16)
        else:
            h = acc
    return h


def mlp_reference_f32(model, x):
    """Full-precision reference (module semantics)."""
    h = x
    for i, (w, b) in enumerate(model.params):
        h = h @ w + b
        if i < model.n_hidden:
            h = _apply_act(h, model.activation)
    return h


if __name__ == "__main__":
    key = jax.random.PRNGKey(0)
    k_in, k_model = jax.random.split(key)

    batch, inputs, outputs = 8, 4, 1
    hidden_layers = (32, 16)

    x = jax.random.normal(k_in, (batch, inputs), jnp.float32)

    # Exercise all three fused activation paths.
    for activation in ("relu", "tanh", "sigmoid"):
        model = MLPPallas(inputs=inputs, outputs=outputs,
                          hidden_layers=hidden_layers,
                          activation=activation, key=k_model)
        out = jax.block_until_ready(model(x))
        assert out.shape == (batch, outputs), out.shape

        # Tight check vs. a reference with identical (bf16 operand / f32 accum) math.
        ref_bf16 = mlp_reference_bf16(model, x)
        err = float(jnp.max(jnp.abs(out - ref_bf16)))
        assert jnp.allclose(out, ref_bf16, atol=2e-4, rtol=2e-4), \
            f"{activation}: bf16-path max err {err}"

        # Loose check vs. full-f32 module semantics (bf16 quantization slack).
        ref_f32 = mlp_reference_f32(model, x)
        err32 = float(jnp.max(jnp.abs(out - ref_f32)))
        assert jnp.allclose(out, ref_f32, atol=5e-2, rtol=5e-2), \
            f"{activation}: f32-path max err {err32}"

    # Non-multiple-of-8 batch to exercise row padding.
    model = MLPPallas(inputs=inputs, outputs=outputs, hidden_layers=hidden_layers,
                      activation="relu", key=k_model)
    x5 = jax.random.normal(k_in, (5, inputs), jnp.float32)
    out5 = jax.block_until_ready(model(x5))
    ref5 = mlp_reference_bf16(model, x5)
    assert out5.shape == (5, outputs)
    assert jnp.allclose(out5, ref5, atol=2e-4, rtol=2e-4)

    print("KERNEL_OK")
</pallas_src>

<mosaic_0001>
module attributes {stable_mosaic.version = 11 : i64} {
  func.func @_mlp_kernel(%arg0: i32, %arg1: memref<8x128xbf16, #tpu.memory_space<vmem>>, %arg2: memref<128x128xbf16, #tpu.memory_space<vmem>>, %arg3: memref<1x128xf32, #tpu.memory_space<vmem>>, %arg4: memref<128x128xbf16, #tpu.memory_space<vmem>>, %arg5: memref<1x128xf32, #tpu.memory_space<vmem>>, %arg6: memref<128x128xbf16, #tpu.memory_space<vmem>>, %arg7: memref<1x128xf32, #tpu.memory_space<vmem>>, %arg8: memref<8x128xf32, #tpu.memory_space<vmem>>) attributes {dimension_semantics = [#tpu.dimension_semantics<parallel>], iteration_bounds = array<i64: 1>, scalar_prefetch = 0 : i64, scratch_operands = 0 : i64, tpu.core_type = #tpu.core_type<tc>, window_params = [{transform_indices = @transform_0, window_bounds = array<i64: 8, 128>}, {pipeline_mode = #tpu.pipeline_mode<synchronous>, transform_indices = @transform_1, window_bounds = array<i64: 128, 128>}, {pipeline_mode = #tpu.pipeline_mode<synchronous>, transform_indices = @transform_2, window_bounds = array<i64: 1, 128>}, {pipeline_mode = #tpu.pipeline_mode<synchronous>, transform_indices = @transform_3, window_bounds = array<i64: 128, 128>}, {pipeline_mode = #tpu.pipeline_mode<synchronous>, transform_indices = @transform_4, window_bounds = array<i64: 1, 128>}, {pipeline_mode = #tpu.pipeline_mode<synchronous>, transform_indices = @transform_5, window_bounds = array<i64: 128, 128>}, {pipeline_mode = #tpu.pipeline_mode<synchronous>, transform_indices = @transform_6, window_bounds = array<i64: 1, 128>}, {transform_indices = @transform_7, window_bounds = array<i64: 8, 128>}]} {
    %c0 = arith.constant 0 : index
    %c0_0 = arith.constant 0 : index
    %0 = vector.load %arg1[%c0, %c0_0] : memref<8x128xbf16, #tpu.memory_space<vmem>>, vector<8x128xbf16>
    %c0_1 = arith.constant 0 : index
    %c0_2 = arith.constant 0 : index
    %1 = vector.load %arg2[%c0_1, %c0_2] : memref<128x128xbf16, #tpu.memory_space<vmem>>, vector<128x128xbf16>
    %c0_3 = arith.constant 0 : index
    %c0_4 = arith.constant 0 : index
    %2 = vector.load %arg3[%c0_3, %c0_4] : memref<1x128xf32, #tpu.memory_space<vmem>>, vector<1x128xf32>
    %cst = arith.constant dense<0.000000e+00> : vector<8x128xf32>
    %3 = tpu.matmul %0, %1, %cst {dimension_numbers = #tpu.dot_dimension_numbers<[1], [0], [0], [1], [0, 0, 1, 1], [], []>} : vector<8x128xbf16>, vector<128x128xbf16>, vector<8x128xf32> -> vector<8x128xf32>
    %4 = vector.broadcast %2 : vector<1x128xf32> to vector<8x128xf32>
    %5 = arith.addf %3, %4 : vector<8x128xf32>
    %cst_5 = arith.constant 0.000000e+00 : f32
    %6 = vector.broadcast %cst_5 : f32 to vector<8x128xf32>
    %7 = arith.maximumf %5, %6 : vector<8x128xf32>
    %8 = arith.truncf %7 : vector<8x128xf32> to vector<8x128xbf16>
    %c0_6 = arith.constant 0 : index
    %c0_7 = arith.constant 0 : index
    %9 = vector.load %arg4[%c0_6, %c0_7] : memref<128x128xbf16, #tpu.memory_space<vmem>>, vector<128x128xbf16>
    %c0_8 = arith.constant 0 : index
    %c0_9 = arith.constant 0 : index
    %10 = vector.load %arg5[%c0_8, %c0_9] : memref<1x128xf32, #tpu.memory_space<vmem>>, vector<1x128xf32>
    %cst_10 = arith.constant dense<0.000000e+00> : vector<8x128xf32>
    %11 = tpu.matmul %8, %9, %cst_10 {dimension_numbers = #tpu.dot_dimension_numbers<[1], [0], [0], [1], [0, 0, 1, 1], [], []>} : vector<8x128xbf16>, vector<128x128xbf16>, vector<8x128xf32> -> vector<8x128xf32>
    %12 = vector.broadcast %10 : vector<1x128xf32> to vector<8x128xf32>
    %13 = arith.addf %11, %12 : vector<8x128xf32>
    %cst_11 = arith.constant 0.000000e+00 : f32
    %14 = vector.broadcast %cst_11 : f32 to vector<8x128xf32>
    %15 = arith.maximumf %13, %14 : vector<8x128xf32>
    %16 = arith.truncf %15 : vector<8x128xf32> to vector<8x128xbf16>
    %c0_12 = arith.constant 0 : index
    %c0_13 = arith.constant 0 : index
    %17 = vector.load %arg6[%c0_12, %c0_13] : memref<128x128xbf16, #tpu.memory_space<vmem>>, vector<128x128xbf16>
    %c0_14 = arith.constant 0 : index
    %c0_15 = arith.constant 0 : index
    %18 = vector.load %arg7[%c0_14, %c0_15] : memref<1x128xf32, #tpu.memory_space<vmem>>, vector<1x128xf32>
    %cst_16 = arith.constant dense<0.000000e+00> : vector<8x128xf32>
    %19 = tpu.matmul %16, %17, %cst_16 {dimension_numbers = #tpu.dot_dimension_numbers<[1], [0], [0], [1], [0, 0, 1, 1], [], []>} : vector<8x128xbf16>, vector<128x128xbf16>, vector<8x128xf32> -> vector<8x128xf32>
    %20 = vector.broadcast %18 : vector<1x128xf32> to vector<8x128xf32>
    %21 = arith.addf %19, %20 : vector<8x128xf32>
    %c0_17 = arith.constant 0 : index
    %c0_18 = arith.constant 0 : index
    %22 = vector.load %arg8[%c0_17, %c0_18] : memref<8x128xf32, #tpu.memory_space<vmem>>, vector<8x128xf32>
    tpu.vector_store %arg8[%c0_17, %c0_18], %21 {strides = array<i32>} : memref<8x128xf32, #tpu.memory_space<vmem>>, vector<8x128xf32>,
    return
  }
  func.func @transform_0(%arg0: i32) -> (i32, i32) {
    %c0_i32 = arith.constant 0 : i32
    %c0_i32_0 = arith.constant 0 : i32
    return %arg0, %c0_i32 : i32, i32
  }
  func.func @transform_1(%arg0: i32) -> (i32, i32) {
    %c0_i32 = arith.constant 0 : i32
    %c0_i32_0 = arith.constant 0 : i32
    %c0_i32_1 = arith.constant 0 : i32
    return %c0_i32, %c0_i32_0 : i32, i32
  }
  func.func @transform_2(%arg0: i32) -> (i32, i32) {
    %c0_i32 = arith.constant 0 : i32
    %c0_i32_0 = arith.constant 0 : i32
    %c0_i32_1 = arith.constant 0 : i32
    return %c0_i32, %c0_i32_0 : i32, i32
  }
  func.func @transform_3(%arg0: i32) -> (i32, i32) {
    %c0_i32 = arith.constant 0 : i32
    %c0_i32_0 = arith.constant 0 : i32
    %c0_i32_1 = arith.constant 0 : i32
    return %c0_i32, %c0_i32_0 : i32, i32
  }
  func.func @transform_4(%arg0: i32) -> (i32, i32) {
    %c0_i32 = arith.constant 0 : i32
    %c0_i32_0 = arith.constant 0 : i32
    %c0_i32_1 = arith.constant 0 : i32
    return %c0_i32, %c0_i32_0 : i32, i32
  }
  func.func @transform_5(%arg0: i32) -> (i32, i32) {
    %c0_i32 = arith.constant 0 : i32
    %c0_i32_0 = arith.constant 0 : i32
    %c0_i32_1 = arith.constant 0 : i32
    return %c0_i32, %c0_i32_0 : i32, i32
  }
  func.func @transform_6(%arg0: i32) -> (i32, i32) {
    %c0_i32 = arith.constant 0 : i32
    %c0_i32_0 = arith.constant 0 : i32
    %c0_i32_1 = arith.constant 0 : i32
    return %c0_i32, %c0_i32_0 : i32, i32
  }
  func.func @transform_7(%arg0: i32) -> (i32, i32) {
    %c0_i32 = arith.constant 0 : i32
    %c0_i32_0 = arith.constant 0 : i32
    return %arg0, %c0_i32 : i32, i32
  }
}

module attributes {stable_mosaic.version = 11 : i64} {
  func.func @_mlp_kernel(%arg0: i32, %arg1: memref<8x128xbf16, #tpu.memory_space<vmem>>, %arg2: memref<128x128xbf16, #tpu.memory_space<vmem>>, %arg3: memref<1x128xf32, #tpu.memory_space<vmem>>, %arg4: memref<128x128xbf16, #tpu.memory_space<vmem>>, %arg5: memref<1x128xf32, #tpu.memory_space<vmem>>, %arg6: memref<128x128xbf16, #tpu.memory_space<vmem>>, %arg7: memref<1x128xf32, #tpu.memory_space<vmem>>, %arg8: memref<8x128xf32, #tpu.memory_space<vmem>>) attributes {dimension_semantics = [#tpu.dimension_semantics<parallel>], iteration_bounds = array<i64: 1>, scalar_prefetch = 0 : i64, scratch_operands = 0 : i64, tpu.core_type = #tpu.core_type<tc>, window_params = [{transform_indices = @transform_0, window_bounds = array<i64: 8, 128>}, {pipeline_mode = #tpu.pipeline_mode<synchronous>, transform_indices = @transform_1, window_bounds = array<i64: 128, 128>}, {pipeline_mode = #tpu.pipeline_mode<synchronous>, transform_indices = @transform_2, window_bounds = array<i64: 1, 128>}, {pipeline_mode = #tpu.pipeline_mode<synchronous>, transform_indices = @transform_3, window_bounds = array<i64: 128, 128>}, {pipeline_mode = #tpu.pipeline_mode<synchronous>, transform_indices = @transform_4, window_bounds = array<i64: 1, 128>}, {pipeline_mode = #tpu.pipeline_mode<synchronous>, transform_indices = @transform_5, window_bounds = array<i64: 128, 128>}, {pipeline_mode = #tpu.pipeline_mode<synchronous>, transform_indices = @transform_6, window_bounds = array<i64: 1, 128>}, {transform_indices = @transform_7, window_bounds = array<i64: 8, 128>}]} {
    %c0 = arith.constant 0 : index
    %c0_0 = arith.constant 0 : index
    %0 = vector.load %arg1[%c0, %c0_0] : memref<8x128xbf16, #tpu.memory_space<vmem>>, vector<8x128xbf16>
    %c0_1 = arith.constant 0 : index
    %c0_2 = arith.constant 0 : index
    %1 = vector.load %arg2[%c0_1, %c0_2] : memref<128x128xbf16, #tpu.memory_space<vmem>>, vector<128x128xbf16>
    %c0_3 = arith.constant 0 : index
    %c0_4 = arith.constant 0 : index
    %2 = vector.load %arg3[%c0_3, %c0_4] : memref<1x128xf32, #tpu.memory_space<vmem>>, vector<1x128xf32>
    %cst = arith.constant dense<0.000000e+00> : vector<8x128xf32>
    %3 = tpu.matmul %0, %1, %cst {dimension_numbers = #tpu.dot_dimension_numbers<[1], [0], [0], [1], [0, 0, 1, 1], [], []>} : vector<8x128xbf16>, vector<128x128xbf16>, vector<8x128xf32> -> vector<8x128xf32>
    %4 = vector.broadcast %2 : vector<1x128xf32> to vector<8x128xf32>
    %5 = arith.addf %3, %4 : vector<8x128xf32>
    %cst_5 = arith.constant 0.000000e+00 : f32
    %6 = vector.broadcast %cst_5 : f32 to vector<8x128xf32>
    %7 = arith.maximumf %5, %6 : vector<8x128xf32>
    %8 = arith.truncf %7 : vector<8x128xf32> to vector<8x128xbf16>
    %c0_6 = arith.constant 0 : index
    %c0_7 = arith.constant 0 : index
    %9 = vector.load %arg4[%c0_6, %c0_7] : memref<128x128xbf16, #tpu.memory_space<vmem>>, vector<128x128xbf16>
    %c0_8 = arith.constant 0 : index
    %c0_9 = arith.constant 0 : index
    %10 = vector.load %arg5[%c0_8, %c0_9] : memref<1x128xf32, #tpu.memory_space<vmem>>, vector<1x128xf32>
    %cst_10 = arith.constant dense<0.000000e+00> : vector<8x128xf32>
    %11 = tpu.matmul %8, %9, %cst_10 {dimension_numbers = #tpu.dot_dimension_numbers<[1], [0], [0], [1], [0, 0, 1, 1], [], []>} : vector<8x128xbf16>, vector<128x128xbf16>, vector<8x128xf32> -> vector<8x128xf32>
    %12 = vector.broadcast %10 : vector<1x128xf32> to vector<8x128xf32>
    %13 = arith.addf %11, %12 : vector<8x128xf32>
    %cst_11 = arith.constant 0.000000e+00 : f32
    %14 = vector.broadcast %cst_11 : f32 to vector<8x128xf32>
    %15 = arith.maximumf %13, %14 : vector<8x128xf32>
    %16 = arith.truncf %15 : vector<8x128xf32> to vector<8x128xbf16>
    %c0_12 = arith.constant 0 : index
    %c0_13 = arith.constant 0 : index
    %17 = vector.load %arg6[%c0_12, %c0_13] : memref<128x128xbf16, #tpu.memory_space<vmem>>, vector<128x128xbf16>
    %c0_14 = arith.constant 0 : index
    %c0_15 = arith.constant 0 : index
    %18 = vector.load %arg7[%c0_14, %c0_15] : memref<1x128xf32, #tpu.memory_space<vmem>>, vector<1x128xf32>
    %cst_16 = arith.constant dense<0.000000e+00> : vector<8x128xf32>
    %19 = tpu.matmul %16, %17, %cst_16 {dimension_numbers = #tpu.dot_dimension_numbers<[1], [0], [0], [1], [0, 0, 1, 1], [], []>} : vector<8x128xbf16>, vector<128x128xbf16>, vector<8x128xf32> -> vector<8x128xf32>
    %20 = vector.broadcast %18 : vector<1x128xf32> to vector<8x128xf32>
    %21 = arith.addf %19, %20 : vector<8x128xf32>
    %c0_17 = arith.constant 0 : index
    %c0_18 = arith.constant 0 : index
    %22 = vector.load %arg8[%c0_17, %c0_18] : memref<8x128xf32, #tpu.memory_space<vmem>>, vector<8x128xf32>
    tpu.vector_store %arg8[%c0_17, %c0_18], %21 {strides = array<i32>} : memref<8x128xf32, #tpu.memory_space<vmem>>, vector<8x128xf32>,
    return
  }
  func.func @transform_0(%arg0: i32) -> (i32, i32) {
    %c0_i32 = arith.constant 0 : i32
    %c0_i32_0 = arith.constant 0 : i32
    return %arg0, %c0_i32 : i32, i32
  }
  func.func @transform_1(%arg0: i32) -> (i32, i32) {
    %c0_i32 = arith.constant 0 : i32
    %c0_i32_0 = arith.constant 0 : i32
    %c0_i32_1 = arith.constant 0 : i32
    return %c0_i32, %c0_i32_0 : i32, i32
  }
  func.func @transform_2(%arg0: i32) -> (i32, i32) {
    %c0_i32 = arith.constant 0 : i32
    %c0_i32_0 = arith.constant 0 : i32
    %c0_i32_1 = arith.constant 0 : i32
    return %c0_i32, %c0_i32_0 : i32, i32
  }
  func.func @transform_3(%arg0: i32) -> (i32, i32) {
    %c0_i32 = arith.constant 0 : i32
    %c0_i32_0 = arith.constant 0 : i32
    %c0_i32_1 = arith.constant 0 : i32
    return %c0_i32, %c0_i32_0 : i32, i32
  }
  func.func @transform_4(%arg0: i32) -> (i32, i32) {
    %c0_i32 = arith.constant 0 : i32
    %c0_i32_0 = arith.constant 0 : i32
    %c0_i32_1 = arith.constant 0 : i32
    return %c0_i32, %c0_i32_0 : i32, i32
  }
  func.func @transform_5(%arg0: i32) -> (i32, i32) {
    %c0_i32 = arith.constant 0 : i32
    %c0_i32_0 = arith.constant 0 : i32
    %c0_i32_1 = arith.constant 0 : i32
    return %c0_i32, %c0_i32_0 : i32, i32
  }
  func.func @transform_6(%arg0: i32) -> (i32, i32) {
    %c0_i32 = arith.constant 0 : i32
    %c0_i32_0 = arith.constant 0 : i32
    %c0_i32_1 = arith.constant 0 : i32
    return %c0_i32, %c0_i32_0 : i32, i32
  }
  func.func @transform_7(%arg0: i32) -> (i32, i32) {
    %c0_i32 = arith.constant 0 : i32
    %c0_i32_0 = arith.constant 0 : i32
    return %arg0, %c0_i32 : i32, i32
  }
}

</mosaic_0001>

<llo_original>
// kernel: _mlp_forward.1
$region0: #{_mlp_forward.1}
  #allocation0 [shape = 'u32[]', space=smem, size = 0x4, offset = 0x4, fixed_abs, tag = 'smem constant byte address 0x4 - core index']
  #allocation1 [shape = 'u32[144,128]{1,0:T(1,128)}', space=vmem, size = 0x12000, scoped, tag = 'internal scratch']
  %s0 = inlined_call_operand.vmem [shape: bf16[8,128], index: 0, kind: input, shape index: {}]
  %s1 = inlined_call_operand.hbm [shape: bf16[128,128], index: 1, kind: input, shape index: {}]
  %s2 = inlined_call_operand.vmem [shape: f32[1,128], index: 2, kind: input, shape index: {}]
  %s3 = inlined_call_operand.hbm [shape: bf16[128,128], index: 3, kind: input, shape index: {}]
  %s4 = inlined_call_operand.vmem [shape: f32[1,128], index: 4, kind: input, shape index: {}]
  %s5 = inlined_call_operand.hbm [shape: bf16[128,128], index: 5, kind: input, shape index: {}]
  %s6 = inlined_call_operand.vmem [shape: f32[1,128], index: 6, kind: input, shape index: {}]
  %s7 = inlined_call_operand.vmem [shape: f32[8,128], index: 7, kind: output, shape index: {}]
  %s8 = sld [smem:[#allocation0]]
  $region50: #{_mlp_forward.1} parent=0
    _
  %s10 = ssub.s32 1, %s8
  %s11 = scalar_select 0, %s10, %s8
  $region1: #{_mlp_forward.1} parent=0
    #allocation2 [shape = 'u8[32768]{0}', space=vmem, size = 0x8000, scoped, tag = 'input window, operand 1, single buffered']
    #allocation3 [shape = 's32[1]{0}', space=sflag, size = 0x4, scoped, tag = 'scoped memory for _mlp_forward.1']
    #allocation4 [shape = 'u8[32768]{0}', space=vmem, size = 0x8000, scoped, tag = 'input window, operand 3, single buffered']
    #allocation5 [shape = 's32[1]{0}', space=sflag, size = 0x4, scoped, tag = 'scoped memory for _mlp_forward.1']
    #allocation6 [shape = 'u8[32768]{0}', space=vmem, size = 0x8000, scoped, tag = 'input window, operand 5, single buffered']
    %12 = vsyncpa [#allocation3], 0
    %13 = vsyncpa [#allocation5], 0
    // Predicated region
    $region2: #{_mlp_forward.1} parent=1 // pred_check
      _
    $region3: #{_mlp_forward.1} parent=1 // pred_check_branch
      %15 = sbr.rel (0) target = $region5
    $region4: #{_mlp_forward.1} parent=1 // pred_region
      _
    $region5: #{_mlp_forward.1} parent=1 // pred_fallthru
      _
    // Predicated region
    $region6: #{_mlp_forward.1} parent=1 // pred_check
      _
    $region7: #{_mlp_forward.1} parent=1 // pred_check_branch
      %17 = sbr.rel (0) target = $region9
    $region8: #{_mlp_forward.1} parent=1 // pred_region
      %s19 = ssub.s32 1024, 1024
      %20 = vsyncadd [#allocation3], %s19
      %s21 = sshll.u32 [#allocation2], 4
      %s22 = int_to_ptr.vmem [resolvable:$true] %s21
      %27 = dma.hbm_to_vmem [thread:$0]  %s1, 1024, %s22, [#allocation3], 64, 64, 4
    $region9: #{_mlp_forward.1} parent=1 // pred_fallthru
      _
    // Predicated region
    $region10: #{_mlp_forward.1} parent=1 // pred_check
      _
    $region11: #{_mlp_forward.1} parent=1 // pred_check_branch
      %29 = sbr.rel (0) target = $region13
    $region12: #{_mlp_forward.1} parent=1 // pred_region
      _
    $region13: #{_mlp_forward.1} parent=1 // pred_fallthru
      _
    // Predicated region
    $region14: #{_mlp_forward.1} parent=1 // pred_check
      _
    $region15: #{_mlp_forward.1} parent=1 // pred_check_branch
      %31 = sbr.rel (0) target = $region17
    $region16: #{_mlp_forward.1} parent=1 // pred_region
      %s33 = ssub.s32 1024, 1024
      %34 = vsyncadd [#allocation5], %s33
      %s35 = sshll.u32 [#allocation4], 4
      %s36 = int_to_ptr.vmem [resolvable:$true] %s35
      %41 = dma.hbm_to_vmem [thread:$0]  %s3, 1024, %s36, [#allocation5], 64, 64, 4
    $region17: #{_mlp_forward.1} parent=1 // pred_fallthru
      _
    // Predicated region
    $region18: #{_mlp_forward.1} parent=1 // pred_check
      _
    $region19: #{_mlp_forward.1} parent=1 // pred_check_branch
      %43 = sbr.rel (0) target = $region21
    $region20: #{_mlp_forward.1} parent=1 // pred_region
      _
    $region21: #{_mlp_forward.1} parent=1 // pred_fallthru
      _
    // Predicated region
    $region22: #{_mlp_forward.1} parent=1 // pred_check
      _
    $region23: #{_mlp_forward.1} parent=1 // pred_check_branch
      %45 = sbr.rel (0) target = $region25
    $region24: #{_mlp_forward.1} parent=1 // pred_region
      %s47 = ssub.s32 1024, 1024
      %48 = vsyncadd [#allocation5], %s47
      %s49 = sshll.u32 [#allocation6], 4
      %s50 = int_to_ptr.vmem [resolvable:$true] %s49
      %55 = dma.hbm_to_vmem [thread:$0]  %s5, 1024, %s50, [#allocation5], 64, 64, 4
    $region25: #{_mlp_forward.1} parent=1 // pred_fallthru
      _
    // Predicated region
    $region26: #{_mlp_forward.1} parent=1 // pred_check
      _
    $region27: #{_mlp_forward.1} parent=1 // pred_check_branch
      %57 = sbr.rel (0) target = $region29
    $region28: #{_mlp_forward.1} parent=1 // pred_region
      _
    $region29: #{_mlp_forward.1} parent=1 // pred_fallthru
      _
    // Predicated region
    $region30: #{_mlp_forward.1} parent=1 // pred_check
      _
    $region31: #{_mlp_forward.1} parent=1 // pred_check_branch
      %59 = sbr.rel (0) target = $region33
    $region32: #{_mlp_forward.1} parent=1 // pred_region
      %60 = dma.done [#allocation3], 1024
    $region33: #{_mlp_forward.1} parent=1 // pred_fallthru
      _
    // Predicated region
    $region34: #{_mlp_forward.1} parent=1 // pred_check
      _
    $region35: #{_mlp_forward.1} parent=1 // pred_check_branch
      %62 = sbr.rel (0) target = $region37
    $region36: #{_mlp_forward.1} parent=1 // pred_region
      %63 = dma.done [#allocation5], 1024
    $region37: #{_mlp_forward.1} parent=1 // pred_fallthru
      _
    // Predicated region
    $region38: #{_mlp_forward.1} parent=1 // pred_check
      _
    $region39: #{_mlp_forward.1} parent=1 // pred_check_branch
      %65 = sbr.rel (0) target = $region41
    $region40: #{_mlp_forward.1} parent=1 // pred_region
      %66 = dma.done [#allocation5], 1024
    $region41: #{_mlp_forward.1} parent=1 // pred_fallthru
      _
    %v68 = vld [vmem:[%s0] sm:$0xf]
    %v69 = vld [vmem:[#allocation2] sm:$0xf]
    %v70 = vld [vmem:[#allocation2 + $0x4] sm:$0xf]
    %v71 = vld [vmem:[#allocation2 + $0x8] sm:$0xf]
    %v72 = vld [vmem:[#allocation2 + $0xc] sm:$0xf]
    %v73 = vld [vmem:[#allocation2 + $0x10] sm:$0xf]
    %v74 = vld [vmem:[#allocation2 + $0x14] sm:$0xf]
    %v75 = vld [vmem:[#allocation2 + $0x18] sm:$0xf]
    %v76 = vld [vmem:[#allocation2 + $0x1c] sm:$0xf]
    %v77 = vld [vmem:[#allocation2 + $0x20] sm:$0xf]
    %v78 = vld [vmem:[#allocation2 + $0x24] sm:$0xf]
    %v79 = vld [vmem:[#allocation2 + $0x28] sm:$0xf]
    %v80 = vld [vmem:[#allocation2 + $0x2c] sm:$0xf]
    %v81 = vld [vmem:[#allocation2 + $0x30] sm:$0xf]
    %v82 = vld [vmem:[#allocation2 + $0x34] sm:$0xf]
    %v83 = vld [vmem:[#allocation2 + $0x38] sm:$0xf]
    %v84 = vld [vmem:[#allocation2 + $0x3c] sm:$0xf]
    %v85 = vld [vmem:[%s2] sm:$0x1]
    %v87 = vlaneseq
    %v88 = vshrl.u32 %v87, 7
    %v89 = vsub.s32 0, %v88
    %v90 = vrot.slane %v85, %v89
    %v108 = vunpack.c.l.b16 %v69
    %v109 = vunpack.c.l.b16 %v70
    %v110 = vunpack.c.l.b16 %v71
    %v111 = vunpack.c.l.b16 %v72
    %v112 = vunpack.c.l.b16 %v73
    %v113 = vunpack.c.l.b16 %v74
    %v114 = vunpack.c.l.b16 %v75
    %v115 = vunpack.c.l.b16 %v76
    %v116 = vunpack.c.l.b16 %v77
    %v117 = vunpack.c.l.b16 %v78
    %v118 = vunpack.c.l.b16 %v79
    %v119 = vunpack.c.l.b16 %v80
    %v120 = vunpack.c.l.b16 %v81
    %v121 = vunpack.c.l.b16 %v82
    %v122 = vunpack.c.l.b16 %v83
    %v123 = vunpack.c.l.b16 %v84
    %v124 = vpack.c.b16 %v109, %v108
    %v125 = vpack.c.b16 %v111, %v110
    %v126 = vpack.c.b16 %v113, %v112
    %v127 = vpack.c.b16 %v115, %v114
    %v128 = vpack.c.b16 %v117, %v116
    %v129 = vpack.c.b16 %v119, %v118
    %v130 = vpack.c.b16 %v121, %v120
    %v131 = vpack.c.b16 %v123, %v122
    %140 = vmatprep.subr.bf16.mxu0 0
    %141 = vmatpush1.bf16.msra.mxu0 %v124
    %142 = vmatprep.subr.bf16.mxu0 0
    %143 = vmatpush1.bf16.msra.mxu0 %v125
    %144 = vmatprep.subr.bf16.mxu0 0
    %145 = vmatpush1.bf16.msra.mxu0 %v126
    %146 = vmatprep.subr.bf16.mxu0 0
    %147 = vmatpush1.bf16.msra.mxu0 %v127
    %148 = vmatprep.subr.bf16.mxu0 0
    %149 = vmatpush1.bf16.msra.mxu0 %v128
    %150 = vmatprep.subr.bf16.mxu0 0
    %151 = vmatpush1.bf16.msra.mxu0 %v129
    %152 = vmatprep.subr.bf16.mxu0 0
    %153 = vmatpush1.bf16.msra.mxu0 %v130
    %154 = vmatprep.subr.bf16.mxu0 0
    %155 = vmatpush1.bf16.msra.mxu0 %v131
    %156 = vmatprep.subr.bf16.mxu0 0
    %157 = vmatpush1.bf16.msra.mxu0 0
    %158 = vmatprep.subr.bf16.mxu0 0
    %159 = vmatpush1.bf16.msra.mxu0 0
    %160 = vmatprep.subr.bf16.mxu0 0
    %161 = vmatpush1.bf16.msra.mxu0 0
    %162 = vmatprep.subr.bf16.mxu0 0
    %163 = vmatpush1.bf16.msra.mxu0 0
    %164 = vmatprep.subr.bf16.mxu0 0
    %165 = vmatpush1.bf16.msra.mxu0 0
    %166 = vmatprep.subr.bf16.mxu0 0
    %167 = vmatpush1.bf16.msra.mxu0 0
    %168 = vmatprep.subr.bf16.mxu0 0
    %169 = vmatpush1.bf16.msra.mxu0 0
    %170 = vmatprep.subr.bf16.mxu0 0
    %171 = vmatpush1.bf16.msra.mxu0 0
    %172 = vmatprep.mubr.bf16.mxu0 0
    %173 = vmatmul.mubr.bf16.gmra.mrb[0].mxu0 %v68
    %v174 = vpop.f32.mrb[0].mxu0
    %v175 = vadd.f32 %v90, %v174
    %v176 = vpop.f32.mrb[0].mxu0
    %v177 = vpop.f32.mrb[0].mxu0
    %v178 = vpop.f32.mrb[0].mxu0
    %179 = vdwg.mxu0
    %v180 = vmax.f32 %v175, 0.0
    %v181 = vpack.c.bf16 %v180, %v180
    %v182 = vld [vmem:[#allocation4] sm:$0xf]
    %v183 = vld [vmem:[#allocation4 + $0x4] sm:$0xf]
    %v184 = vld [vmem:[#allocation4 + $0x8] sm:$0xf]
    %v185 = vld [vmem:[#allocation4 + $0xc] sm:$0xf]
    %v186 = vld [vmem:[#allocation4 + $0x10] sm:$0xf]
    %v187 = vld [vmem:[#allocation4 + $0x14] sm:$0xf]
    %v188 = vld [vmem:[#allocation4 + $0x18] sm:$0xf]
    %v189 = vld [vmem:[#allocation4 + $0x1c] sm:$0xf]
    %v190 = vld [vmem:[#allocation4 + $0x20] sm:$0xf]
    %v191 = vld [vmem:[#allocation4 + $0x24] sm:$0xf]
    %v192 = vld [vmem:[#allocation4 + $0x28] sm:$0xf]
    %v193 = vld [vmem:[#allocation4 + $0x2c] sm:$0xf]
    %v194 = vld [vmem:[#allocation4 + $0x30] sm:$0xf]
    %v195 = vld [vmem:[#allocation4 + $0x34] sm:$0xf]
    %v196 = vld [vmem:[#allocation4 + $0x38] sm:$0xf]
    %v197 = vld [vmem:[#allocation4 + $0x3c] sm:$0xf]
    %v198 = vld [vmem:[%s4] sm:$0x1]
    %v200 = vlaneseq
    %v201 = vshrl.u32 %v200, 7
    %v202 = vsub.s32 0, %v201
    %v203 = vrot.slane %v198, %v202
    %v221 = vunpack.c.l.b16 %v182
    %v222 = vunpack.c.l.b16 %v183
    %v223 = vunpack.c.l.b16 %v184
    %v224 = vunpack.c.l.b16 %v185
    %v225 = vunpack.c.l.b16 %v186
    %v226 = vunpack.c.l.b16 %v187
    %v227 = vunpack.c.l.b16 %v188
    %v228 = vunpack.c.l.b16 %v189
    %v229 = vunpack.c.l.b16 %v190
    %v230 = vunpack.c.l.b16 %v191
    %v231 = vunpack.c.l.b16 %v192
    %v232 = vunpack.c.l.b16 %v193
    %v233 = vunpack.c.l.b16 %v194
    %v234 = vunpack.c.l.b16 %v195
    %v235 = vunpack.c.l.b16 %v196
    %v236 = vunpack.c.l.b16 %v197
    %v237 = vpack.c.b16 %v222, %v221
    %v238 = vpack.c.b16 %v224, %v223
    %v239 = vpack.c.b16 %v226, %v225
    %v240 = vpack.c.b16 %v228, %v227
    %v241 = vpack.c.b16 %v230, %v229
    %v242 = vpack.c.b16 %v232, %v231
    %v243 = vpack.c.b16 %v234, %v233
    %v244 = vpack.c.b16 %v236, %v235
    %253 = vmatprep.subr.bf16.mxu0 0
    %254 = vmatpush1.bf16.msra.mxu0 %v237
    %255 = vmatprep.subr.bf16.mxu0 0
    %256 = vmatpush1.bf16.msra.mxu0 %v238
    %257 = vmatprep.subr.bf16.mxu0 0
    %258 = vmatpush1.bf16.msra.mxu0 %v239
    %259 = vmatprep.subr.bf16.mxu0 0
    %260 = vmatpush1.bf16.msra.mxu0 %v240
    %261 = vmatprep.subr.bf16.mxu0 0
    %262 = vmatpush1.bf16.msra.mxu0 %v241
    %263 = vmatprep.subr.bf16.mxu0 0
    %264 = vmatpush1.bf16.msra.mxu0 %v242
    %265 = vmatprep.subr.bf16.mxu0 0
    %266 = vmatpush1.bf16.msra.mxu0 %v243
    %267 = vmatprep.subr.bf16.mxu0 0
    %268 = vmatpush1.bf16.msra.mxu0 %v244
    %269 = vmatprep.subr.bf16.mxu0 0
    %270 = vmatpush1.bf16.msra.mxu0 0
    %271 = vmatprep.subr.bf16.mxu0 0
    %272 = vmatpush1.bf16.msra.mxu0 0
    %273 = vmatprep.subr.bf16.mxu0 0
    %274 = vmatpush1.bf16.msra.mxu0 0
    %275 = vmatprep.subr.bf16.mxu0 0
    %276 = vmatpush1.bf16.msra.mxu0 0
    %277 = vmatprep.subr.bf16.mxu0 0
    %278 = vmatpush1.bf16.msra.mxu0 0
    %279 = vmatprep.subr.bf16.mxu0 0
    %280 = vmatpush1.bf16.msra.mxu0 0
    %281 = vmatprep.subr.bf16.mxu0 0
    %282 = vmatpush1.bf16.msra.mxu0 0
    %283 = vmatprep.subr.bf16.mxu0 0
    %284 = vmatpush1.bf16.msra.mxu0 0
    %285 = vmatprep.mubr.bf16.mxu0 0
    %286 = vmatmul.mubr.bf16.gmra.mrb[0].mxu0 %v181
    %v287 = vpop.f32.mrb[0].mxu0
    %v288 = vadd.f32 %v203, %v287
    %v289 = vpop.f32.mrb[0].mxu0
    %v290 = vpop.f32.mrb[0].mxu0
    %v291 = vpop.f32.mrb[0].mxu0
    %292 = vdwg.mxu0
    %v293 = vmax.f32 %v288, 0.0
    %v294 = vpack.c.bf16 %v293, %v293
    %v295 = vld [vmem:[#allocation6] sm:$0xf]
    %v296 = vld [vmem:[#allocation6 + $0x4] sm:$0xf]
    %v297 = vld [vmem:[#allocation6 + $0x8] sm:$0xf]
    %v298 = vld [vmem:[#allocation6 + $0xc] sm:$0xf]
    %v299 = vld [vmem:[#allocation6 + $0x10] sm:$0xf]
    %v300 = vld [vmem:[#allocation6 + $0x14] sm:$0xf]
    %v301 = vld [vmem:[#allocation6 + $0x18] sm:$0xf]
    %v302 = vld [vmem:[#allocation6 + $0x1c] sm:$0xf]
    %v303 = vld [vmem:[#allocation6 + $0x20] sm:$0xf]
    %v304 = vld [vmem:[#allocation6 + $0x24] sm:$0xf]
    %v305 = vld [vmem:[#allocation6 + $0x28] sm:$0xf]
    %v306 = vld [vmem:[#allocation6 + $0x2c] sm:$0xf]
    %v307 = vld [vmem:[#allocation6 + $0x30] sm:$0xf]
    %v308 = vld [vmem:[#allocation6 + $0x34] sm:$0xf]
    %v309 = vld [vmem:[#allocation6 + $0x38] sm:$0xf]
    %v310 = vld [vmem:[#allocation6 + $0x3c] sm:$0xf]
    %v311 = vld [vmem:[%s6] sm:$0x1]
    %v313 = vlaneseq
    %v314 = vshrl.u32 %v313, 7
    %v315 = vsub.s32 0, %v314
    %v316 = vrot.slane %v311, %v315
    %v334 = vunpack.c.l.b16 %v295
    %v335 = vunpack.c.l.b16 %v296
    %v336 = vunpack.c.l.b16 %v297
    %v337 = vunpack.c.l.b16 %v298
    %v338 = vunpack.c.l.b16 %v299
    %v339 = vunpack.c.l.b16 %v300
    %v340 = vunpack.c.l.b16 %v301
    %v341 = vunpack.c.l.b16 %v302
    %v342 = vunpack.c.l.b16 %v303
    %v343 = vunpack.c.l.b16 %v304
    %v344 = vunpack.c.l.b16 %v305
    %v345 = vunpack.c.l.b16 %v306
    %v346 = vunpack.c.l.b16 %v307
    %v347 = vunpack.c.l.b16 %v308
    %v348 = vunpack.c.l.b16 %v309
    %v349 = vunpack.c.l.b16 %v310
    %v350 = vpack.c.b16 %v335, %v334
    %v351 = vpack.c.b16 %v337, %v336
    %v352 = vpack.c.b16 %v339, %v338
    %v353 = vpack.c.b16 %v341, %v340
    %v354 = vpack.c.b16 %v343, %v342
    %v355 = vpack.c.b16 %v345, %v344
    %v356 = vpack.c.b16 %v347, %v346
    %v357 = vpack.c.b16 %v349, %v348
    %366 = vmatprep.subr.bf16.mxu0 0
    %367 = vmatpush1.bf16.msra.mxu0 %v350
    %368 = vmatprep.subr.bf16.mxu0 0
    %369 = vmatpush1.bf16.msra.mxu0 %v351
    %370 = vmatprep.subr.bf16.mxu0 0
    %371 = vmatpush1.bf16.msra.mxu0 %v352
    %372 = vmatprep.subr.bf16.mxu0 0
    %373 = vmatpush1.bf16.msra.mxu0 %v353
    %374 = vmatprep.subr.bf16.mxu0 0
    %375 = vmatpush1.bf16.msra.mxu0 %v354
    %376 = vmatprep.subr.bf16.mxu0 0
    %377 = vmatpush1.bf16.msra.mxu0 %v355
    %378 = vmatprep.subr.bf16.mxu0 0
    %379 = vmatpush1.bf16.msra.mxu0 %v356
    %380 = vmatprep.subr.bf16.mxu0 0
    %381 = vmatpush1.bf16.msra.mxu0 %v357
    %382 = vmatprep.subr.bf16.mxu0 0
    %383 = vmatpush1.bf16.msra.mxu0 0
    %384 = vmatprep.subr.bf16.mxu0 0
    %385 = vmatpush1.bf16.msra.mxu0 0
    %386 = vmatprep.subr.bf16.mxu0 0
    %387 = vmatpush1.bf16.msra.mxu0 0
    %388 = vmatprep.subr.bf16.mxu0 0
    %389 = vmatpush1.bf16.msra.mxu0 0
    %390 = vmatprep.subr.bf16.mxu0 0
    %391 = vmatpush1.bf16.msra.mxu0 0
    %392 = vmatprep.subr.bf16.mxu0 0
    %393 = vmatpush1.bf16.msra.mxu0 0
    %394 = vmatprep.subr.bf16.mxu0 0
    %395 = vmatpush1.bf16.msra.mxu0 0
    %396 = vmatprep.subr.bf16.mxu0 0
    %397 = vmatpush1.bf16.msra.mxu0 0
    %398 = vmatprep.mubr.bf16.mxu0 0
    %399 = vmatmul.mubr.bf16.gmra.mrb[0].mxu0 %v294
    %v400 = vpop.f32.mrb[0].mxu0
    %v401 = vadd.f32 %v316, %v400
    %v402 = vpop.f32.mrb[0].mxu0
    %v403 = vpop.f32.mrb[0].mxu0
    %v404 = vpop.f32.mrb[0].mxu0
    %405 = vdwg.mxu0
    %406 = vst [vmem:[%s7] sm:$0xff] %v401
    // Predicated region
    $region42: #{_mlp_forward.1} parent=1 // pred_check
      _
    $region43: #{_mlp_forward.1} parent=1 // pred_check_branch
      %408 = sbr.rel (0) target = $region45
    $region44: #{_mlp_forward.1} parent=1 // pred_region
      _
    $region45: #{_mlp_forward.1} parent=1 // pred_fallthru
      _
    // Predicated region
    $region46: #{_mlp_forward.1} parent=1 // pred_check
      _
    $region47: #{_mlp_forward.1} parent=1 // pred_check_branch
      %410 = sbr.rel (0) target = $region49
    $region48: #{_mlp_forward.1} parent=1 // pred_region
      _
    $region49: #{_mlp_forward.1} parent=1 // pred_fallthru
      _
    %411 = vsyncpa [#allocation3], 1
    %412 = vsyncpa [#allocation5], 1

// kernel: _mlp_forward.1
$region0: #{_mlp_forward.1}
  #allocation0 [shape = 'u32[]', space=smem, size = 0x4, offset = 0x4, fixed_abs, tag = 'smem constant byte address 0x4 - core index']
  #allocation1 [shape = 'u32[144,128]{1,0:T(1,128)}', space=vmem, size = 0x12000, scoped, tag = 'internal scratch']
  %s0 = inlined_call_operand.vmem [shape: bf16[8,128], index: 0, kind: input, shape index: {}]
  %s1 = inlined_call_operand.hbm [shape: bf16[128,128], index: 1, kind: input, shape index: {}]
  %s2 = inlined_call_operand.vmem [shape: f32[1,128], index: 2, kind: input, shape index: {}]
  %s3 = inlined_call_operand.hbm [shape: bf16[128,128], index: 3, kind: input, shape index: {}]
  %s4 = inlined_call_operand.vmem [shape: f32[1,128], index: 4, kind: input, shape index: {}]
  %s5 = inlined_call_operand.hbm [shape: bf16[128,128], index: 5, kind: input, shape index: {}]
  %s6 = inlined_call_operand.vmem [shape: f32[1,128], index: 6, kind: input, shape index: {}]
  %s7 = inlined_call_operand.vmem [shape: f32[8,128], index: 7, kind: output, shape index: {}]
  %s8 = sld [smem:[#allocation0]]
  $region50: #{_mlp_forward.1} parent=0
    _
  %s10 = ssub.s32 1, %s8
  %s11 = scalar_select 0, %s10, %s8
  $region1: #{_mlp_forward.1} parent=0
    #allocation2 [shape = 'u8[32768]{0}', space=vmem, size = 0x8000, scoped, tag = 'input window, operand 1, single buffered']
    #allocation3 [shape = 's32[1]{0}', space=sflag, size = 0x4, scoped, tag = 'scoped memory for _mlp_forward.1']
    #allocation4 [shape = 'u8[32768]{0}', space=vmem, size = 0x8000, scoped, tag = 'input window, operand 3, single buffered']
    #allocation5 [shape = 's32[1]{0}', space=sflag, size = 0x4, scoped, tag = 'scoped memory for _mlp_forward.1']
    #allocation6 [shape = 'u8[32768]{0}', space=vmem, size = 0x8000, scoped, tag = 'input window, operand 5, single buffered']
    %12 = vsyncpa [#allocation3], 0
    %13 = vsyncpa [#allocation5], 0
    // Predicated region
    $region2: #{_mlp_forward.1} parent=1 // pred_check
      _
    $region3: #{_mlp_forward.1} parent=1 // pred_check_branch
      %15 = sbr.rel (0) target = $region5
    $region4: #{_mlp_forward.1} parent=1 // pred_region
      _
    $region5: #{_mlp_forward.1} parent=1 // pred_fallthru
      _
    // Predicated region
    $region6: #{_mlp_forward.1} parent=1 // pred_check
      _
    $region7: #{_mlp_forward.1} parent=1 // pred_check_branch
      %17 = sbr.rel (0) target = $region9
    $region8: #{_mlp_forward.1} parent=1 // pred_region
      %s19 = ssub.s32 1024, 1024
      %20 = vsyncadd [#allocation3], %s19
      %s21 = sshll.u32 [#allocation2], 4
      %s22 = int_to_ptr.vmem [resolvable:$true] %s21
      %27 = dma.hbm_to_vmem [thread:$0]  %s1, 1024, %s22, [#allocation3], 64, 64, 4
    $region9: #{_mlp_forward.1} parent=1 // pred_fallthru
      _
    // Predicated region
    $region10: #{_mlp_forward.1} parent=1 // pred_check
      _
    $region11: #{_mlp_forward.1} parent=1 // pred_check_branch
      %29 = sbr.rel (0) target = $region13
    $region12: #{_mlp_forward.1} parent=1 // pred_region
      _
    $region13: #{_mlp_forward.1} parent=1 // pred_fallthru
      _
    // Predicated region
    $region14: #{_mlp_forward.1} parent=1 // pred_check
      _
    $region15: #{_mlp_forward.1} parent=1 // pred_check_branch
      %31 = sbr.rel (0) target = $region17
    $region16: #{_mlp_forward.1} parent=1 // pred_region
      %s33 = ssub.s32 1024, 1024
      %34 = vsyncadd [#allocation5], %s33
      %s35 = sshll.u32 [#allocation4], 4
      %s36 = int_to_ptr.vmem [resolvable:$true] %s35
      %41 = dma.hbm_to_vmem [thread:$0]  %s3, 1024, %s36, [#allocation5], 64, 64, 4
    $region17: #{_mlp_forward.1} parent=1 // pred_fallthru
      _
    // Predicated region
    $region18: #{_mlp_forward.1} parent=1 // pred_check
      _
    $region19: #{_mlp_forward.1} parent=1 // pred_check_branch
      %43 = sbr.rel (0) target = $region21
    $region20: #{_mlp_forward.1} parent=1 // pred_region
      _
    $region21: #{_mlp_forward.1} parent=1 // pred_fallthru
      _
    // Predicated region
    $region22: #{_mlp_forward.1} parent=1 // pred_check
      _
    $region23: #{_mlp_forward.1} parent=1 // pred_check_branch
      %45 = sbr.rel (0) target = $region25
    $region24: #{_mlp_forward.1} parent=1 // pred_region
      %s47 = ssub.s32 1024, 1024
      %48 = vsyncadd [#allocation5], %s47
      %s49 = sshll.u32 [#allocation6], 4
      %s50 = int_to_ptr.vmem [resolvable:$true] %s49
      %55 = dma.hbm_to_vmem [thread:$0]  %s5, 1024, %s50, [#allocation5], 64, 64, 4
    $region25: #{_mlp_forward.1} parent=1 // pred_fallthru
      _
    // Predicated region
    $region26: #{_mlp_forward.1} parent=1 // pred_check
      _
    $region27: #{_mlp_forward.1} parent=1 // pred_check_branch
      %57 = sbr.rel (0) target = $region29
    $region28: #{_mlp_forward.1} parent=1 // pred_region
      _
    $region29: #{_mlp_forward.1} parent=1 // pred_fallthru
      _
    // Predicated region
    $region30: #{_mlp_forward.1} parent=1 // pred_check
      _
    $region31: #{_mlp_forward.1} parent=1 // pred_check_branch
      %59 = sbr.rel (0) target = $region33
    $region32: #{_mlp_forward.1} parent=1 // pred_region
      %60 = dma.done [#allocation3], 1024
    $region33: #{_mlp_forward.1} parent=1 // pred_fallthru
      _
    // Predicated region
    $region34: #{_mlp_forward.1} parent=1 // pred_check
      _
    $region35: #{_mlp_forward.1} parent=1 // pred_check_branch
      %62 = sbr.rel (0) target = $region37
    $region36: #{_mlp_forward.1} parent=1 // pred_region
      %63 = dma.done [#allocation5], 1024
    $region37: #{_mlp_forward.1} parent=1 // pred_fallthru
      _
    // Predicated region
    $region38: #{_mlp_forward.1} parent=1 // pred_check
      _
    $region39: #{_mlp_forward.1} parent=1 // pred_check_branch
      %65 = sbr.rel (0) target = $region41
    $region40: #{_mlp_forward.1} parent=1 // pred_region
      %66 = dma.done [#allocation5], 1024
    $region41: #{_mlp_forward.1} parent=1 // pred_fallthru
      _
    %v68 = vld [vmem:[%s0] sm:$0xf]
    %v69 = vld [vmem:[#allocation2] sm:$0xf]
    %v70 = vld [vmem:[#allocation2 + $0x4] sm:$0xf]
    %v71 = vld [vmem:[#allocation2 + $0x8] sm:$0xf]
    %v72 = vld [vmem:[#allocation2 + $0xc] sm:$0xf]
    %v73 = vld [vmem:[#allocation2 + $0x10] sm:$0xf]
    %v74 = vld [vmem:[#allocation2 + $0x14] sm:$0xf]
    %v75 = vld [vmem:[#allocation2 + $0x18] sm:$0xf]
    %v76 = vld [vmem:[#allocation2 + $0x1c] sm:$0xf]
    %v77 = vld [vmem:[#allocation2 + $0x20] sm:$0xf]
    %v78 = vld [vmem:[#allocation2 + $0x24] sm:$0xf]
    %v79 = vld [vmem:[#allocation2 + $0x28] sm:$0xf]
    %v80 = vld [vmem:[#allocation2 + $0x2c] sm:$0xf]
    %v81 = vld [vmem:[#allocation2 + $0x30] sm:$0xf]
    %v82 = vld [vmem:[#allocation2 + $0x34] sm:$0xf]
    %v83 = vld [vmem:[#allocation2 + $0x38] sm:$0xf]
    %v84 = vld [vmem:[#allocation2 + $0x3c] sm:$0xf]
    %v85 = vld [vmem:[%s2] sm:$0x1]
    %v87 = vlaneseq
    %v88 = vshrl.u32 %v87, 7
    %v89 = vsub.s32 0, %v88
    %v90 = vrot.slane %v85, %v89
    %v108 = vunpack.c.l.b16 %v69
    %v109 = vunpack.c.l.b16 %v70
    %v110 = vunpack.c.l.b16 %v71
    %v111 = vunpack.c.l.b16 %v72
    %v112 = vunpack.c.l.b16 %v73
    %v113 = vunpack.c.l.b16 %v74
    %v114 = vunpack.c.l.b16 %v75
    %v115 = vunpack.c.l.b16 %v76
    %v116 = vunpack.c.l.b16 %v77
    %v117 = vunpack.c.l.b16 %v78
    %v118 = vunpack.c.l.b16 %v79
    %v119 = vunpack.c.l.b16 %v80
    %v120 = vunpack.c.l.b16 %v81
    %v121 = vunpack.c.l.b16 %v82
    %v122 = vunpack.c.l.b16 %v83
    %v123 = vunpack.c.l.b16 %v84
    %v124 = vpack.c.b16 %v109, %v108
    %v125 = vpack.c.b16 %v111, %v110
    %v126 = vpack.c.b16 %v113, %v112
    %v127 = vpack.c.b16 %v115, %v114
    %v128 = vpack.c.b16 %v117, %v116
    %v129 = vpack.c.b16 %v119, %v118
    %v130 = vpack.c.b16 %v121, %v120
    %v131 = vpack.c.b16 %v123, %v122
    %140 = vmatprep.subr.bf16.mxu0 0
    %141 = vmatpush1.bf16.msra.mxu0 %v124
    %142 = vmatprep.subr.bf16.mxu0 0
    %143 = vmatpush1.bf16.msra.mxu0 %v125
    %144 = vmatprep.subr.bf16.mxu0 0
    %145 = vmatpush1.bf16.msra.mxu0 %v126
    %146 = vmatprep.subr.bf16.mxu0 0
    %147 = vmatpush1.bf16.msra.mxu0 %v127
    %148 = vmatprep.subr.bf16.mxu0 0
    %149 = vmatpush1.bf16.msra.mxu0 %v128
    %150 = vmatprep.subr.bf16.mxu0 0
    %151 = vmatpush1.bf16.msra.mxu0 %v129
    %152 = vmatprep.subr.bf16.mxu0 0
    %153 = vmatpush1.bf16.msra.mxu0 %v130
    %154 = vmatprep.subr.bf16.mxu0 0
    %155 = vmatpush1.bf16.msra.mxu0 %v131
    %156 = vmatprep.subr.bf16.mxu0 0
    %157 = vmatpush1.bf16.msra.mxu0 0
    %158 = vmatprep.subr.bf16.mxu0 0
    %159 = vmatpush1.bf16.msra.mxu0 0
    %160 = vmatprep.subr.bf16.mxu0 0
    %161 = vmatpush1.bf16.msra.mxu0 0
    %162 = vmatprep.subr.bf16.mxu0 0
    %163 = vmatpush1.bf16.msra.mxu0 0
    %164 = vmatprep.subr.bf16.mxu0 0
    %165 = vmatpush1.bf16.msra.mxu0 0
    %166 = vmatprep.subr.bf16.mxu0 0
    %167 = vmatpush1.bf16.msra.mxu0 0
    %168 = vmatprep.subr.bf16.mxu0 0
    %169 = vmatpush1.bf16.msra.mxu0 0
    %170 = vmatprep.subr.bf16.mxu0 0
    %171 = vmatpush1.bf16.msra.mxu0 0
    %172 = vmatprep.mubr.bf16.mxu0 0
    %173 = vmatmul.mubr.bf16.gmra.mrb[0].mxu0 %v68
    %v174 = vpop.f32.mrb[0].mxu0
    %v175 = vadd.f32 %v90, %v174
    %v176 = vpop.f32.mrb[0].mxu0
    %v177 = vpop.f32.mrb[0].mxu0
    %v178 = vpop.f32.mrb[0].mxu0
    %179 = vdwg.mxu0
    %v180 = vmax.f32 %v175, 0.0
    %v181 = vpack.c.bf16 %v180, %v180
    %v182 = vld [vmem:[#allocation4] sm:$0xf]
    %v183 = vld [vmem:[#allocation4 + $0x4] sm:$0xf]
    %v184 = vld [vmem:[#allocation4 + $0x8] sm:$0xf]
    %v185 = vld [vmem:[#allocation4 + $0xc] sm:$0xf]
    %v186 = vld [vmem:[#allocation4 + $0x10] sm:$0xf]
    %v187 = vld [vmem:[#allocation4 + $0x14] sm:$0xf]
    %v188 = vld [vmem:[#allocation4 + $0x18] sm:$0xf]
    %v189 = vld [vmem:[#allocation4 + $0x1c] sm:$0xf]
    %v190 = vld [vmem:[#allocation4 + $0x20] sm:$0xf]
    %v191 = vld [vmem:[#allocation4 + $0x24] sm:$0xf]
    %v192 = vld [vmem:[#allocation4 + $0x28] sm:$0xf]
    %v193 = vld [vmem:[#allocation4 + $0x2c] sm:$0xf]
    %v194 = vld [vmem:[#allocation4 + $0x30] sm:$0xf]
    %v195 = vld [vmem:[#allocation4 + $0x34] sm:$0xf]
    %v196 = vld [vmem:[#allocation4 + $0x38] sm:$0xf]
    %v197 = vld [vmem:[#allocation4 + $0x3c] sm:$0xf]
    %v198 = vld [vmem:[%s4] sm:$0x1]
    %v200 = vlaneseq
    %v201 = vshrl.u32 %v200, 7
    %v202 = vsub.s32 0, %v201
    %v203 = vrot.slane %v198, %v202
    %v221 = vunpack.c.l.b16 %v182
    %v222 = vunpack.c.l.b16 %v183
    %v223 = vunpack.c.l.b16 %v184
    %v224 = vunpack.c.l.b16 %v185
    %v225 = vunpack.c.l.b16 %v186
    %v226 = vunpack.c.l.b16 %v187
    %v227 = vunpack.c.l.b16 %v188
    %v228 = vunpack.c.l.b16 %v189
    %v229 = vunpack.c.l.b16 %v190
    %v230 = vunpack.c.l.b16 %v191
    %v231 = vunpack.c.l.b16 %v192
    %v232 = vunpack.c.l.b16 %v193
    %v233 = vunpack.c.l.b16 %v194
    %v234 = vunpack.c.l.b16 %v195
    %v235 = vunpack.c.l.b16 %v196
    %v236 = vunpack.c.l.b16 %v197
    %v237 = vpack.c.b16 %v222, %v221
    %v238 = vpack.c.b16 %v224, %v223
    %v239 = vpack.c.b16 %v226, %v225
    %v240 = vpack.c.b16 %v228, %v227
    %v241 = vpack.c.b16 %v230, %v229
    %v242 = vpack.c.b16 %v232, %v231
    %v243 = vpack.c.b16 %v234, %v233
    %v244 = vpack.c.b16 %v236, %v235
    %253 = vmatprep.subr.bf16.mxu0 0
    %254 = vmatpush1.bf16.msra.mxu0 %v237
    %255 = vmatprep.subr.bf16.mxu0 0
    %256 = vmatpush1.bf16.msra.mxu0 %v238
    %257 = vmatprep.subr.bf16.mxu0 0
    %258 = vmatpush1.bf16.msra.mxu0 %v239
    %259 = vmatprep.subr.bf16.mxu0 0
    %260 = vmatpush1.bf16.msra.mxu0 %v240
    %261 = vmatprep.subr.bf16.mxu0 0
    %262 = vmatpush1.bf16.msra.mxu0 %v241
    %263 = vmatprep.subr.bf16.mxu0 0
    %264 = vmatpush1.bf16.msra.mxu0 %v242
    %265 = vmatprep.subr.bf16.mxu0 0
    %266 = vmatpush1.bf16.msra.mxu0 %v243
    %267 = vmatprep.subr.bf16.mxu0 0
    %268 = vmatpush1.bf16.msra.mxu0 %v244
    %269 = vmatprep.subr.bf16.mxu0 0
    %270 = vmatpush1.bf16.msra.mxu0 0
    %271 = vmatprep.subr.bf16.mxu0 0
    %272 = vmatpush1.bf16.msra.mxu0 0
    %273 = vmatprep.subr.bf16.mxu0 0
    %274 = vmatpush1.bf16.msra.mxu0 0
    %275 = vmatprep.subr.bf16.mxu0 0
    %276 = vmatpush1.bf16.msra.mxu0 0
    %277 = vmatprep.subr.bf16.mxu0 0
    %278 = vmatpush1.bf16.msra.mxu0 0
    %279 = vmatprep.subr.bf16.mxu0 0
    %280 = vmatpush1.bf16.msra.mxu0 0
    %281 = vmatprep.subr.bf16.mxu0 0
    %282 = vmatpush1.bf16.msra.mxu0 0
    %283 = vmatprep.subr.bf16.mxu0 0
    %284 = vmatpush1.bf16.msra.mxu0 0
    %285 = vmatprep.mubr.bf16.mxu0 0
    %286 = vmatmul.mubr.bf16.gmra.mrb[0].mxu0 %v181
    %v287 = vpop.f32.mrb[0].mxu0
    %v288 = vadd.f32 %v203, %v287
    %v289 = vpop.f32.mrb[0].mxu0
    %v290 = vpop.f32.mrb[0].mxu0
    %v291 = vpop.f32.mrb[0].mxu0
    %292 = vdwg.mxu0
    %v293 = vmax.f32 %v288, 0.0
    %v294 = vpack.c.bf16 %v293, %v293
    %v295 = vld [vmem:[#allocation6] sm:$0xf]
    %v296 = vld [vmem:[#allocation6 + $0x4] sm:$0xf]
    %v297 = vld [vmem:[#allocation6 + $0x8] sm:$0xf]
    %v298 = vld [vmem:[#allocation6 + $0xc] sm:$0xf]
    %v299 = vld [vmem:[#allocation6 + $0x10] sm:$0xf]
    %v300 = vld [vmem:[#allocation6 + $0x14] sm:$0xf]
    %v301 = vld [vmem:[#allocation6 + $0x18] sm:$0xf]
    %v302 = vld [vmem:[#allocation6 + $0x1c] sm:$0xf]
    %v303 = vld [vmem:[#allocation6 + $0x20] sm:$0xf]
    %v304 = vld [vmem:[#allocation6 + $0x24] sm:$0xf]
    %v305 = vld [vmem:[#allocation6 + $0x28] sm:$0xf]
    %v306 = vld [vmem:[#allocation6 + $0x2c] sm:$0xf]
    %v307 = vld [vmem:[#allocation6 + $0x30] sm:$0xf]
    %v308 = vld [vmem:[#allocation6 + $0x34] sm:$0xf]
    %v309 = vld [vmem:[#allocation6 + $0x38] sm:$0xf]
    %v310 = vld [vmem:[#allocation6 + $0x3c] sm:$0xf]
    %v311 = vld [vmem:[%s6] sm:$0x1]
    %v313 = vlaneseq
    %v314 = vshrl.u32 %v313, 7
    %v315 = vsub.s32 0, %v314
    %v316 = vrot.slane %v311, %v315
    %v334 = vunpack.c.l.b16 %v295
    %v335 = vunpack.c.l.b16 %v296
    %v336 = vunpack.c.l.b16 %v297
    %v337 = vunpack.c.l.b16 %v298
    %v338 = vunpack.c.l.b16 %v299
    %v339 = vunpack.c.l.b16 %v300
    %v340 = vunpack.c.l.b16 %v301
    %v341 = vunpack.c.l.b16 %v302
    %v342 = vunpack.c.l.b16 %v303
    %v343 = vunpack.c.l.b16 %v304
    %v344 = vunpack.c.l.b16 %v305
    %v345 = vunpack.c.l.b16 %v306
    %v346 = vunpack.c.l.b16 %v307
    %v347 = vunpack.c.l.b16 %v308
    %v348 = vunpack.c.l.b16 %v309
    %v349 = vunpack.c.l.b16 %v310
    %v350 = vpack.c.b16 %v335, %v334
    %v351 = vpack.c.b16 %v337, %v336
    %v352 = vpack.c.b16 %v339, %v338
    %v353 = vpack.c.b16 %v341, %v340
    %v354 = vpack.c.b16 %v343, %v342
    %v355 = vpack.c.b16 %v345, %v344
    %v356 = vpack.c.b16 %v347, %v346
    %v357 = vpack.c.b16 %v349, %v348
    %366 = vmatprep.subr.bf16.mxu0 0
    %367 = vmatpush1.bf16.msra.mxu0 %v350
    %368 = vmatprep.subr.bf16.mxu0 0
    %369 = vmatpush1.bf16.msra.mxu0 %v351
    %370 = vmatprep.subr.bf16.mxu0 0
    %371 = vmatpush1.bf16.msra.mxu0 %v352
    %372 = vmatprep.subr.bf16.mxu0 0
    %373 = vmatpush1.bf16.msra.mxu0 %v353
    %374 = vmatprep.subr.bf16.mxu0 0
    %375 = vmatpush1.bf16.msra.mxu0 %v354
    %376 = vmatprep.subr.bf16.mxu0 0
    %377 = vmatpush1.bf16.msra.mxu0 %v355
    %378 = vmatprep.subr.bf16.mxu0 0
    %379 = vmatpush1.bf16.msra.mxu0 %v356
    %380 = vmatprep.subr.bf16.mxu0 0
    %381 = vmatpush1.bf16.msra.mxu0 %v357
    %382 = vmatprep.subr.bf16.mxu0 0
    %383 = vmatpush1.bf16.msra.mxu0 0
    %384 = vmatprep.subr.bf16.mxu0 0
    %385 = vmatpush1.bf16.msra.mxu0 0
    %386 = vmatprep.subr.bf16.mxu0 0
    %387 = vmatpush1.bf16.msra.mxu0 0
    %388 = vmatprep.subr.bf16.mxu0 0
    %389 = vmatpush1.bf16.msra.mxu0 0
    %390 = vmatprep.subr.bf16.mxu0 0
    %391 = vmatpush1.bf16.msra.mxu0 0
    %392 = vmatprep.subr.bf16.mxu0 0
    %393 = vmatpush1.bf16.msra.mxu0 0
    %394 = vmatprep.subr.bf16.mxu0 0
    %395 = vmatpush1.bf16.msra.mxu0 0
    %396 = vmatprep.subr.bf16.mxu0 0
    %397 = vmatpush1.bf16.msra.mxu0 0
    %398 = vmatprep.mubr.bf16.mxu0 0
    %399 = vmatmul.mubr.bf16.gmra.mrb[0].mxu0 %v294
    %v400 = vpop.f32.mrb[0].mxu0
    %v401 = vadd.f32 %v316, %v400
    %v402 = vpop.f32.mrb[0].mxu0
    %v403 = vpop.f32.mrb[0].mxu0
    %v404 = vpop.f32.mrb[0].mxu0
    %405 = vdwg.mxu0
    %406 = vst [vmem:[%s7] sm:$0xff] %v401
    // Predicated region
    $region42: #{_mlp_forward.1} parent=1 // pred_check
      _
    $region43: #{_mlp_forward.1} parent=1 // pred_check_branch
      %408 = sbr.rel (0) target = $region45
    $region44: #{_mlp_forward.1} parent=1 // pred_region
      _
    $region45: #{_mlp_forward.1} parent=1 // pred_fallthru
      _
    // Predicated region
    $region46: #{_mlp_forward.1} parent=1 // pred_check
      _
    $region47: #{_mlp_forward.1} parent=1 // pred_check_branch
      %410 = sbr.rel (0) target = $region49
    $region48: #{_mlp_forward.1} parent=1 // pred_region
      _
    $region49: #{_mlp_forward.1} parent=1 // pred_fallthru
      _
    %411 = vsyncpa [#allocation3], 1
    %412 = vsyncpa [#allocation5], 1

</llo_original>
